<compile_context>
chip_gen: v7x
topology: tpu7x:2x2x1
jax: 0.10.0
libtpu: 0.0.40
codegen_flags: <defaults>
</compile_context>

<pallas_src>
import math

import jax
import jax.numpy as jnp
from jax.experimental import pallas as pl
from jax.experimental.pallas import tpu as pltpu


def _round_up(a, b):
    return ((a + b - 1) // b) * b


def _cdiv(a, b):
    return -(-a // b)


def _lif_update_kernel(w_ref, x_ref, o_ref):
    # w_ref: SMEM (2, 1) f32 -- tanh(decay), precomputed in the wrapper
    # x_ref: VMEM (2, TR, C) block -- x_ref[0] = x[...,0] plane, x_ref[1] = x[...,1] plane
    # o_ref: VMEM (TR, C) block (dense, lane-major -> unmasked stores)
    w0 = w_ref[0, 0]
    w1 = w_ref[1, 0]
    o_ref[...] = (w0 * x_ref[0] + w1 * x_ref[1]).astype(o_ref.dtype)


def _plan_tiles(m, itemsize, block_rows, lane_cols):
    """Pick lane-dense plane (R, C) and row tile TR for M flat elements."""
    lane = 128
    sub = {4: 8, 2: 16, 1: 32}.get(itemsize, 8)      # dtype-aware sublane tile
    c = min(lane_cols, _round_up(m, lane))
    r_needed = _cdiv(m, c)

    # Step count: few enough to amortize ~0.35us/step, but >=2 (and even) when
    # there is enough work so both TensorCores get pipelined tiles.
    n_steps = _cdiv(r_needed, block_rows)
    if n_steps == 1 and r_needed >= 4 * sub:
        n_steps = 2
    if n_steps > 1 and n_steps % 2:
        n_steps += 1

    # TR derived from the actual row count -> padding stays small (<~ few %).
    tr = _round_up(_cdiv(r_needed, n_steps), sub)
    r = _round_up(r_needed, tr)
    return c, tr, r, r // tr


def lif_update(x, decay, *, block_rows=512, lane_cols=2048, min_pallas_elems=32768):
    """x: (..., 2), decay: (2, 1)  ->  (..., 1)  (== matmul(x, tanh(decay)))."""
    assert x.shape[-1] == 2, "LIFUpdate expects last dim == 2"
    lead_shape = x.shape[:-1]
    m = math.prod(lead_shape) if lead_shape else 1

    # tanh(decay) hoisted out of the kernel body entirely.
    w = jnp.tanh(decay.astype(jnp.float32)).reshape(2, 1)

    # Degenerate / tiny inputs: a single fused XLA elementwise beats a pallas
    # launch plus the layout-change pass.
    if m == 0 or m < min_pallas_elems:
        xf = x.astype(jnp.float32)
        out = xf[..., 0:1] * w[0, 0] + xf[..., 1:2] * w[1, 0]
        return out.astype(x.dtype)

    itemsize = jnp.dtype(x.dtype).itemsize
    c, tr, r, n_steps = _plan_tiles(m, itemsize, block_rows, lane_cols)
    rc = r * c

    # De-interleave to planar layout: (M, 2) -> (2, M) -> pad -> (2, R, C).
    # transpose + pad + reshape fuse into one XLA copy pass; allow_input_fusion
    # below additionally lets XLA fold this producer into the pallas_call input
    # fetch when supported, removing the extra HBM pass.
    xt = jnp.transpose(x.reshape(m, 2))
    if rc != m:
        xt = jnp.pad(xt, ((0, 0), (0, rc - m)))
    x3 = xt.reshape(2, r, c)

    out = pl.pallas_call(
        _lif_update_kernel,
        out_shape=jax.ShapeDtypeStruct((r, c), x.dtype),
        grid=(n_steps,),
        in_specs=[
            pl.BlockSpec(memory_space=pltpu.MemorySpace.SMEM),   # w (2, 1)
            pl.BlockSpec((2, tr, c), lambda i: (0, i, 0)),       # x planes
        ],
        out_specs=pl.BlockSpec((tr, c), lambda i: (i, 0)),
        compiler_params=pltpu.CompilerParams(
            dimension_semantics=("parallel",),
            vmem_limit_bytes=48 * 1024 * 1024,
            allow_input_fusion=[False, True],   # allow producer fusion on x3
        ),
    )(w, x3)

    return out.reshape(rc)[:m].reshape(*lead_shape, 1)


if __name__ == "__main__":
    key = jax.random.PRNGKey(0)
    k_x, k_d, k_x2 = jax.random.split(key, 3)

    # deterministic init of the (2, 1) 'decay' parameter (torch.randn analog)
    decay = jax.random.normal(k_d, (2, 1), dtype=jnp.float32)

    # small shape consistent with the module: (batch=2, channels=4, spatial=16, feature=2)
    x = jax.random.normal(k_x, (2, 4, 16, 2), dtype=jnp.float32)
    ref = jnp.matmul(x, jnp.tanh(decay))

    # force the pallas path at the small shape (kernel correctness) ...
    out_pallas = jax.block_until_ready(lif_update(x, decay, min_pallas_elems=0))
    assert out_pallas.shape == ref.shape == (2, 4, 16, 1)
    assert jnp.allclose(out_pallas, ref, atol=1e-5, rtol=1e-5)

    # ... and the default dispatch (small-input fast path).
    out_fast = jax.block_until_ready(lif_update(x, decay))
    assert jnp.allclose(out_fast, ref, atol=1e-5, rtol=1e-5)

    # a larger case exercising the multi-step "parallel" grid / big tiles (jitted
    # so the wrapper transpose producer can fuse into the pallas_call input).
    x2 = jax.random.normal(k_x2, (16, 128, 256, 2), dtype=jnp.float32)
    out2 = jax.block_until_ready(jax.jit(lif_update)(x2, decay))
    ref2 = jnp.matmul(x2, jnp.tanh(decay))
    assert out2.shape == ref2.shape == (16, 128, 256, 1)
    assert jnp.allclose(out2, ref2, atol=1e-5, rtol=1e-5)

    print("KERNEL_OK")
</pallas_src>

<mosaic_0001>
module attributes {stable_mosaic.version = 11 : i64} {
  func.func @_lif_update_kernel(%arg0: i32, %arg1: memref<2x1xf32, #tpu.memory_space<smem>>, %arg2: memref<2x8x128xf32, #tpu.memory_space<vmem>>, %arg3: memref<8x128xf32, #tpu.memory_space<vmem>>) attributes {dimension_semantics = [#tpu.dimension_semantics<parallel>], iteration_bounds = array<i64: 1>, scalar_prefetch = 0 : i64, scratch_operands = 0 : i64, tpu.core_type = #tpu.core_type<tc>, window_params = [{transform_indices = @transform_0, window_bounds = array<i64: 2, 1>}, {transform_indices = @transform_1, window_bounds = array<i64: 2, 8, 128>}, {transform_indices = @transform_2, window_bounds = array<i64: 8, 128>}]} {
    %c0 = arith.constant 0 : index
    %c0_0 = arith.constant 0 : index
    %0 = memref.load %arg1[%c0, %c0_0] : memref<2x1xf32, #tpu.memory_space<smem>>
    %c1 = arith.constant 1 : index
    %c0_1 = arith.constant 0 : index
    %1 = memref.load %arg1[%c1, %c0_1] : memref<2x1xf32, #tpu.memory_space<smem>>
    %c0_2 = arith.constant 0 : index
    %c0_3 = arith.constant 0 : index
    %c0_4 = arith.constant 0 : index
    %2 = vector.load %arg2[%c0_2, %c0_3, %c0_4] : memref<2x8x128xf32, #tpu.memory_space<vmem>>, vector<1x8x128xf32>
    %3 = vector.shape_cast %2 : vector<1x8x128xf32> to vector<8x128xf32>
    %4 = vector.broadcast %0 : f32 to vector<8x128xf32>
    %5 = arith.mulf %4, %3 : vector<8x128xf32>
    %c1_5 = arith.constant 1 : index
    %c0_6 = arith.constant 0 : index
    %c0_7 = arith.constant 0 : index
    %6 = vector.load %arg2[%c1_5, %c0_6, %c0_7] : memref<2x8x128xf32, #tpu.memory_space<vmem>>, vector<1x8x128xf32>
    %7 = vector.shape_cast %6 : vector<1x8x128xf32> to vector<8x128xf32>
    %8 = vector.broadcast %1 : f32 to vector<8x128xf32>
    %9 = arith.mulf %8, %7 : vector<8x128xf32>
    %10 = arith.addf %5, %9 : vector<8x128xf32>
    %c0_8 = arith.constant 0 : index
    %c0_9 = arith.constant 0 : index
    %11 = vector.load %arg3[%c0_8, %c0_9] : memref<8x128xf32, #tpu.memory_space<vmem>>, vector<8x128xf32>
    tpu.vector_store %arg3[%c0_8, %c0_9], %10 {strides = array<i32>} : memref<8x128xf32, #tpu.memory_space<vmem>>, vector<8x128xf32>,
    return
  }
  func.func @transform_0(%arg0: i32) -> (i32, i32) {
    %c0_i32 = arith.constant 0 : i32
    %c0_i32_0 = arith.constant 0 : i32
    %c0_i32_1 = arith.constant 0 : i32
    return %c0_i32, %c0_i32_0 : i32, i32
  }
  func.func @transform_1(%arg0: i32) -> (i32, i32, i32) {
    %c0_i32 = arith.constant 0 : i32
    %c0_i32_0 = arith.constant 0 : i32
    %c0_i32_1 = arith.constant 0 : i32
    return %c0_i32, %arg0, %c0_i32_0 : i32, i32, i32
  }
  func.func @transform_2(%arg0: i32) -> (i32, i32) {
    %c0_i32 = arith.constant 0 : i32
    %c0_i32_0 = arith.constant 0 : i32
    return %arg0, %c0_i32 : i32, i32
  }
}

</mosaic_0001>

<llo_original>
// kernel: tpu_custom_call.1
$region0: #{tpu_custom_call.1}
  #allocation0 [shape = 'u32[]', space=smem, size = 0x4, offset = 0x4, fixed_abs, tag = 'smem constant byte address 0x4 - core index']
  #allocation1 [shape = 'u32[144,128]{1,0:T(1,128)}', space=vmem, size = 0x12000, scoped, tag = 'internal scratch']
  %s0 = inlined_call_operand.vmem [shape: f32[2,1], index: 0, kind: input, shape index: {}]
  %s1 = inlined_call_operand.hbm [shape: f32[2,8,128], index: 1, kind: input, shape index: {}]
  %s2 = inlined_call_operand.hbm [shape: f32[8,128], index: 2, kind: output, shape index: {}]
  %s3 = sld [smem:[#allocation0]]
  $region26: #{tpu_custom_call.1} parent=0
    _
  %s5 = ssub.s32 1, %s3
  %s6 = scalar_select 0, %s5, %s3
  $region1: #{tpu_custom_call.1} parent=0
    #allocation2 [shape = 'u8[1024]{0}', space=smem, size = 0x400, scoped, tag = 'input window, operand 0, single buffered']
    #allocation3 [shape = 's32[1]{0}', space=sflag, size = 0x4, scoped, tag = 'scoped memory for tpu_custom_call.1']
    #allocation4 [shape = 's32[1]{0}', space=sflag, size = 0x4, scoped, tag = 'scoped memory for tpu_custom_call.1']
    #allocation5 [shape = 's32[1]{0}', space=sflag, size = 0x4, scoped, tag = 'scoped memory for tpu_custom_call.1']
    #allocation6 [shape = 'u8[8192]{0}', space=vmem, size = 0x2000, scoped, tag = 'input window, operand 1, single buffered']
    #allocation7 [shape = 'u8[4096]{0}', space=vmem, size = 0x1000, scoped, tag = 'output window, operand 0, single buffered']
    %7 = vsyncpa [#allocation5], 0
    %8 = vsyncpa [#allocation3], 0
    %9 = vsyncpa [#allocation4], 0
    // Predicated region
    $region2: #{tpu_custom_call.1} parent=1 // pred_check
      _
    $region3: #{tpu_custom_call.1} parent=1 // pred_check_branch
      %11 = sbr.rel (0) target = $region5
    $region4: #{tpu_custom_call.1} parent=1 // pred_region
      %s13 = ssub.s32 32, 32
      %14 = vsyncadd [#allocation5], %s13
      %s16 = sshll.u32 %s0, 4
      %s17 = int_to_ptr.vmem [resolvable:$true] %s16
      %19 = dma.vmem_to_smem %s17, 32, [#allocation2], [#allocation5]
    $region5: #{tpu_custom_call.1} parent=1 // pred_fallthru
      _
    // Predicated region
    $region6: #{tpu_custom_call.1} parent=1 // pred_check
      _
    $region7: #{tpu_custom_call.1} parent=1 // pred_check_branch
      %21 = sbr.rel (0) target = $region9
    $region8: #{tpu_custom_call.1} parent=1 // pred_region
      %s23 = ssub.s32 256, 256
      %24 = vsyncadd [#allocation3], %s23
      %s25 = sshll.u32 [#allocation6], 4
      %s26 = int_to_ptr.vmem [resolvable:$true] %s25
      %31 = dma.hbm_to_vmem [thread:$0]  %s1, 256, %s26, [#allocation3], 128, 128, 8
    $region9: #{tpu_custom_call.1} parent=1 // pred_fallthru
      _
    // Predicated region
    $region10: #{tpu_custom_call.1} parent=1 // pred_check
      _
    $region11: #{tpu_custom_call.1} parent=1 // pred_check_branch
      %33 = sbr.rel (0) target = $region13
    $region12: #{tpu_custom_call.1} parent=1 // pred_region
      %34 = dma.done [#allocation5], 32
    $region13: #{tpu_custom_call.1} parent=1 // pred_fallthru
      _
    // Predicated region
    $region14: #{tpu_custom_call.1} parent=1 // pred_check
      _
    $region15: #{tpu_custom_call.1} parent=1 // pred_check_branch
      %36 = sbr.rel (0) target = $region17
    $region16: #{tpu_custom_call.1} parent=1 // pred_region
      %37 = dma.done [#allocation3], 256
    $region17: #{tpu_custom_call.1} parent=1 // pred_fallthru
      _
    %38 = sfence
    %s39 = sld [smem:[#allocation2]]
    %s40 = sld [smem:[#allocation2 + $0x80]]
    %v41 = vld [vmem:[#allocation6] sm:$0xff]
    %v42 = vstv %s39
    %v43 = vmul.f32 %v42, %v41
    %s44 = scalar_lea.vmem [#allocation6], 8
    %v45 = vld [vmem:[%s44] sm:$0xff]
    %v46 = vstv %s40
    %v47 = vmul.f32 %v46, %v45
    %v48 = vadd.f32 %v43, %v47
    %49 = vst [vmem:[#allocation7] sm:$0xff] %v48
    // Predicated region
    $region18: #{tpu_custom_call.1} parent=1 // pred_check
      _
    $region19: #{tpu_custom_call.1} parent=1 // pred_check_branch
      %51 = sbr.rel (0) target = $region21
    $region20: #{tpu_custom_call.1} parent=1 // pred_region
      %s53 = ssub.s32 128, 128
      %54 = vsyncadd [#allocation4], %s53
      %s56 = sshll.u32 [#allocation7], 4
      %s57 = int_to_ptr.vmem [resolvable:$true] %s56
      %59 = dma.vmem_to_hbm [thread:$0]  %s57, 128, %s2, [#allocation4]
    $region21: #{tpu_custom_call.1} parent=1 // pred_fallthru
      _
    // Predicated region
    $region22: #{tpu_custom_call.1} parent=1 // pred_check
      _
    $region23: #{tpu_custom_call.1} parent=1 // pred_check_branch
      %61 = sbr.rel (0) target = $region25
    $region24: #{tpu_custom_call.1} parent=1 // pred_region
      %62 = dma.done [#allocation4], 128
    $region25: #{tpu_custom_call.1} parent=1 // pred_fallthru
      _
    %63 = vsyncpa [#allocation3], 1
    %64 = vsyncpa [#allocation4], 1
    %65 = vsyncpa [#allocation5], 1

</llo_original>
